<compile_context>
chip_gen: v7x
topology: tpu7x:2x2x1
jax: 0.10.0
libtpu: 0.0.40
codegen_flags: <defaults>
</compile_context>

<pallas_src>
import functools

import jax
import jax.numpy as jnp
from jax.experimental import pallas as pl
from jax.experimental.pallas import tpu as pltpu


def _round_up(n, m):
    return ((n + m - 1) // m) * m


def _mlp_base_kernel(x_ref, w1_ref, w2_ref, bw_ref, bv_ref,
                     value_ref, hidden_ref):
    # x tile in bf16 for the MXU (no-op if the producer already emits bf16);
    # accumulate in f32.
    x = x_ref[...].astype(jnp.bfloat16)

    # Fused bias/value-weight operand: row 0 = b1, row 1 = b2, row 2 = wv.
    b1 = bw_ref[0:1, :]
    b2 = bw_ref[1:2, :]
    wv = bw_ref[2:3, :]

    # Fused layer 1: [critic | actor] trunks in one lane-dense matmul.
    h1 = jnp.tanh(
        jnp.dot(x, w1_ref[...], preferred_element_type=jnp.float32) + b1)

    # Fused layer 2: block-diagonal weights keep the trunks independent.
    h2 = jnp.tanh(
        jnp.dot(h1.astype(jnp.bfloat16), w2_ref[...],
                preferred_element_type=jnp.float32) + b2)

    # Hidden writeback: either the full [critic | actor] slab or just the
    # actor half (lane-aligned, only used when H % 128 == 0).
    start = h2.shape[-1] - hidden_ref.shape[-1]
    hidden_ref[...] = h2[:, start:].astype(hidden_ref.dtype)

    # Value head: VPU multiply + XLU lane reduction (wv is zero over the actor
    # half, so no slicing needed).  bv is an SMEM scalar.
    v = jnp.sum(h2 * wv, axis=-1, keepdims=True) + bv_ref[0, 0]
    value_ref[...] = v.astype(value_ref.dtype)


@functools.partial(jax.jit, static_argnames=("block_b", "hidden_dtype"))
def mlp_base_forward(x, packed, *, block_b=2048, hidden_dtype=jnp.bfloat16):
    """Returns (value [B,1] f32, hidden_actor [B,H] hidden_dtype)."""
    B, num_in = x.shape
    H2 = packed["w1"].shape[1]   # 2 * hidden_size
    H = H2 // 2

    # ---- batch tile selection ------------------------------------------------
    Bp8 = _round_up(B, 8)
    tb_cap = min(_round_up(block_b, 8), Bp8)
    n_tiles = pl.cdiv(Bp8, tb_cap)
    # Guarantee >= 2 (even) tiles when the batch allows it, so the "parallel"
    # grid axis can be sharded across v7x's two TensorCores (no-op on v5e/v6e).
    if Bp8 >= 16:
        n_tiles = max(n_tiles, 2)
        if n_tiles % 2:
            n_tiles += 1
    TB = _round_up(pl.cdiv(Bp8, n_tiles), 8)
    Bp = _round_up(B, TB)
    if Bp != B:
        x = jnp.pad(x, ((0, Bp - B), (0, 0)))
    grid = (Bp // TB,)

    # ---- output layout -------------------------------------------------------
    # Drop the dead critic half of the writeback when the actor half alone is
    # still lane-dense; otherwise keep the full slab (e.g. H=64 -> 128 lanes).
    actor_only = (H % 128 == 0)
    Ho = H if actor_only else H2

    in_specs = [
        pl.BlockSpec((TB, num_in), lambda i: (i, 0)),          # x (batch tiled)
        pl.BlockSpec((num_in, H2), lambda i: (0, 0)),          # W1 (bf16, resident)
        pl.BlockSpec((H2, H2), lambda i: (0, 0)),              # W2 (bf16, resident)
        pl.BlockSpec((8, H2), lambda i: (0, 0)),               # [b1; b2; wv] f32
        pl.BlockSpec(memory_space=pltpu.MemorySpace.SMEM),     # bv scalar
    ]
    out_specs = (
        pl.BlockSpec((TB, 1), lambda i: (i, 0)),               # value
        pl.BlockSpec((TB, Ho), lambda i: (i, 0)),              # hidden
    )

    # ---- compiler params -----------------------------------------------------
    # Rough per-step VMEM footprint: double-buffered I/O + resident weights +
    # f32 intermediates.  Only raise the scoped limit when we'd exceed the
    # 32 MiB default (very large block_b); keep headroom under v7x's 64 MiB.
    w_bytes = (num_in * H2 + H2 * H2) * 2 + 8 * H2 * 4
    io_bytes = TB * (num_in * x.dtype.itemsize
                     + Ho * jnp.dtype(hidden_dtype).itemsize + 4)
    est_vmem = 2 * io_bytes + 2 * w_bytes + 4 * TB * H2 * 4
    cp_kwargs = dict(dimension_semantics=("parallel",))
    if est_vmem > (28 << 20):
        cp_kwargs["vmem_limit_bytes"] = min(est_vmem + (8 << 20), 56 << 20)

    value, hidden = pl.pallas_call(
        _mlp_base_kernel,
        grid=grid,
        in_specs=in_specs,
        out_specs=out_specs,
        out_shape=(
            jax.ShapeDtypeStruct((Bp, 1), jnp.float32),
            jax.ShapeDtypeStruct((Bp, Ho), hidden_dtype),
        ),
        compiler_params=pltpu.CompilerParams(**cp_kwargs),
    )(x, packed["w1"], packed["w2"], packed["bias"], packed["bv"])

    # Actor hidden: already actor-only, or the second half of the slab.
    # (In a fused pipeline, hand the full slab to the downstream dist-head
    # matmul instead of materializing this slice.)
    hidden_actor = hidden if actor_only else hidden[:, H:]
    if Bp != B:
        value = value[:B]
        hidden_actor = hidden_actor[:B]
    return value, hidden_actor


def init_params(key, num_inputs, hidden_size):
    """Xavier-uniform weights (gain=sqrt(2)), zero biases (matches init_)."""
    gain = jnp.sqrt(2.0)

    def xavier(key, fan_in, fan_out):
        bound = gain * jnp.sqrt(6.0 / (fan_in + fan_out))
        return jax.random.uniform(key, (fan_in, fan_out), jnp.float32,
                                  minval=-bound, maxval=bound)

    ks = jax.random.split(key, 5)
    return {
        "wc1": xavier(ks[0], num_inputs, hidden_size),
        "bc1": jnp.zeros((1, hidden_size), jnp.float32),
        "wc2": xavier(ks[1], hidden_size, hidden_size),
        "bc2": jnp.zeros((1, hidden_size), jnp.float32),
        "wa1": xavier(ks[2], num_inputs, hidden_size),
        "ba1": jnp.zeros((1, hidden_size), jnp.float32),
        "wa2": xavier(ks[3], hidden_size, hidden_size),
        "ba2": jnp.zeros((1, hidden_size), jnp.float32),
        "wv":  xavier(ks[4], hidden_size, 1),
        "bv":  jnp.zeros((1, 1), jnp.float32),
    }


def pack_params(p):
    """Fuse the actor/critic trunks into lane-dense kernel operands."""
    H = p["wc2"].shape[0]
    H2 = 2 * H
    w1 = jnp.concatenate([p["wc1"], p["wa1"]], axis=1).astype(jnp.bfloat16)
    z = jnp.zeros((H, H), jnp.float32)
    w2 = jnp.block([[p["wc2"], z], [z, p["wa2"]]]).astype(jnp.bfloat16)
    # Single (8, 2H) f32 operand: row 0 = b1, row 1 = b2, row 2 = wv
    # (zero-padded over the actor half), rows 3-7 unused.
    bias = jnp.zeros((8, H2), jnp.float32)
    bias = bias.at[0, :].set(jnp.concatenate([p["bc1"][0], p["ba1"][0]]))
    bias = bias.at[1, :].set(jnp.concatenate([p["bc2"][0], p["ba2"][0]]))
    bias = bias.at[2, :H].set(p["wv"][:, 0])
    bv = p["bv"].reshape(1, 1)                                  # SMEM scalar
    return {"w1": w1, "w2": w2, "bias": bias, "bv": bv}


def reference_forward(x, p):
    """Pure-JAX reference emulating the kernel's bf16 weight storage."""
    def b16(a):
        return a.astype(jnp.bfloat16).astype(jnp.float32)

    xb = b16(x)
    hc = jnp.tanh(xb @ b16(p["wc1"]) + p["bc1"])
    hc = jnp.tanh(b16(hc) @ b16(p["wc2"]) + p["bc2"])
    ha = jnp.tanh(xb @ b16(p["wa1"]) + p["ba1"])
    ha = jnp.tanh(b16(ha) @ b16(p["wa2"]) + p["ba2"])
    v = jnp.sum(hc * p["wv"][:, 0][None, :], axis=-1, keepdims=True) + p["bv"]
    return v, ha


def _run_case(key, B, num_inputs, hidden_size, block_b):
    k_x, k_p = jax.random.split(key)
    x = jax.random.normal(k_x, (B, num_inputs), jnp.float32)
    params = init_params(k_p, num_inputs, hidden_size)
    packed = pack_params(params)

    value, hidden_actor = mlp_base_forward(x, packed, block_b=block_b)
    jax.block_until_ready((value, hidden_actor))

    v_ref, a_ref = reference_forward(x, params)
    assert value.shape == (B, 1) and hidden_actor.shape == (B, hidden_size)
    assert jnp.allclose(value, v_ref, atol=2e-3, rtol=2e-3), "value mismatch"
    assert jnp.allclose(hidden_actor.astype(jnp.float32), a_ref,
                        atol=1.5e-2, rtol=1.5e-2), "hidden_actor mismatch"


if __name__ == "__main__":
    key = jax.random.PRNGKey(0)
    k1, k2 = jax.random.split(key)

    # Default module config (hidden_size=64): full 128-lane slab writeback,
    # 2 batch tiles (exercises the batch-tiled / megacore-parallel path).
    _run_case(k1, B=256, num_inputs=32, hidden_size=64, block_b=2048)

    # hidden_size=128 config: actor-only lane-dense writeback path.
    _run_case(k2, B=64, num_inputs=48, hidden_size=128, block_b=2048)

    print("KERNEL_OK")
</pallas_src>

<mosaic_0001>
module attributes {stable_mosaic.version = 11 : i64} {
  func.func @_mlp_base_kernel(%arg0: i32, %arg1: memref<128x32xf32, #tpu.memory_space<vmem>>, %arg2: memref<32x128xbf16, #tpu.memory_space<vmem>>, %arg3: memref<128x128xbf16, #tpu.memory_space<vmem>>, %arg4: memref<8x128xf32, #tpu.memory_space<vmem>>, %arg5: memref<1x1xf32, #tpu.memory_space<smem>>, %arg6: memref<128x1xf32, #tpu.memory_space<vmem>>, %arg7: memref<128x128xbf16, #tpu.memory_space<vmem>>) attributes {dimension_semantics = [#tpu.dimension_semantics<parallel>], iteration_bounds = array<i64: 2>, scalar_prefetch = 0 : i64, scratch_operands = 0 : i64, tpu.core_type = #tpu.core_type<tc>, window_params = [{transform_indices = @transform_0, window_bounds = array<i64: 128, 32>}, {pipeline_mode = #tpu.pipeline_mode<synchronous>, transform_indices = @transform_1, window_bounds = array<i64: 32, 128>}, {pipeline_mode = #tpu.pipeline_mode<synchronous>, transform_indices = @transform_2, window_bounds = array<i64: 128, 128>}, {pipeline_mode = #tpu.pipeline_mode<synchronous>, transform_indices = @transform_3, window_bounds = array<i64: 8, 128>}, {transform_indices = @transform_4, window_bounds = array<i64: 1, 1>}, {transform_indices = @transform_5, window_bounds = array<i64: 128, 1>}, {transform_indices = @transform_6, window_bounds = array<i64: 128, 128>}]} {
    %c0 = arith.constant 0 : index
    %c0_0 = arith.constant 0 : index
    %0 = vector.load %arg1[%c0, %c0_0] : memref<128x32xf32, #tpu.memory_space<vmem>>, vector<128x32xf32>
    %1 = arith.truncf %0 : vector<128x32xf32> to vector<128x32xbf16>
    %c0_1 = arith.constant 0 : index
    %c0_2 = arith.constant 0 : index
    %2 = vector.load %arg4[%c0_1, %c0_2] : memref<8x128xf32, #tpu.memory_space<vmem>>, vector<1x128xf32>
    %c1 = arith.constant 1 : index
    %c0_3 = arith.constant 0 : index
    %3 = vector.load %arg4[%c1, %c0_3] : memref<8x128xf32, #tpu.memory_space<vmem>>, vector<1x128xf32>
    %c2 = arith.constant 2 : index
    %c0_4 = arith.constant 0 : index
    %4 = vector.load %arg4[%c2, %c0_4] : memref<8x128xf32, #tpu.memory_space<vmem>>, vector<1x128xf32>
    %c0_5 = arith.constant 0 : index
    %c0_6 = arith.constant 0 : index
    %5 = vector.load %arg2[%c0_5, %c0_6] : memref<32x128xbf16, #tpu.memory_space<vmem>>, vector<32x128xbf16>
    %cst = arith.constant dense<0.000000e+00> : vector<128x128xf32>
    %6 = tpu.matmul %1, %5, %cst {dimension_numbers = #tpu.dot_dimension_numbers<[1], [0], [0], [1], [0, 0, 1, 1], [], []>} : vector<128x32xbf16>, vector<32x128xbf16>, vector<128x128xf32> -> vector<128x128xf32>
    %7 = vector.broadcast %2 : vector<1x128xf32> to vector<128x128xf32>
    %8 = arith.addf %6, %7 : vector<128x128xf32>
    %9 = math.tanh %8 : vector<128x128xf32>
    %10 = arith.truncf %9 : vector<128x128xf32> to vector<128x128xbf16>
    %c0_7 = arith.constant 0 : index
    %c0_8 = arith.constant 0 : index
    %11 = vector.load %arg3[%c0_7, %c0_8] : memref<128x128xbf16, #tpu.memory_space<vmem>>, vector<128x128xbf16>
    %cst_9 = arith.constant dense<0.000000e+00> : vector<128x128xf32>
    %12 = tpu.matmul %10, %11, %cst_9 {dimension_numbers = #tpu.dot_dimension_numbers<[1], [0], [0], [1], [0, 0, 1, 1], [], []>} : vector<128x128xbf16>, vector<128x128xbf16>, vector<128x128xf32> -> vector<128x128xf32>
    %13 = vector.broadcast %3 : vector<1x128xf32> to vector<128x128xf32>
    %14 = arith.addf %12, %13 : vector<128x128xf32>
    %15 = math.tanh %14 : vector<128x128xf32>
    %16 = arith.truncf %15 : vector<128x128xf32> to vector<128x128xbf16>
    %c0_10 = arith.constant 0 : index
    %c0_11 = arith.constant 0 : index
    %17 = vector.load %arg7[%c0_10, %c0_11] : memref<128x128xbf16, #tpu.memory_space<vmem>>, vector<128x128xbf16>
    tpu.vector_store %arg7[%c0_10, %c0_11], %16 {strides = array<i32>} : memref<128x128xbf16, #tpu.memory_space<vmem>>, vector<128x128xbf16>,
    %18 = vector.broadcast %4 : vector<1x128xf32> to vector<128x128xf32>
    %19 = arith.mulf %15, %18 : vector<128x128xf32>
    %cst_12 = arith.constant dense<0.000000e+00> : vector<128xf32>
    %20 = vector.multi_reduction <add>, %19, %cst_12 [1] : vector<128x128xf32> to vector<128xf32>
    %21 = vector.shape_cast %20 : vector<128xf32> to vector<128x1xf32>
    %c0_13 = arith.constant 0 : index
    %c0_14 = arith.constant 0 : index
    %22 = memref.load %arg5[%c0_13, %c0_14] : memref<1x1xf32, #tpu.memory_space<smem>>
    %23 = vector.broadcast %22 : f32 to vector<128x1xf32>
    %24 = arith.addf %21, %23 : vector<128x1xf32>
    %c0_15 = arith.constant 0 : index
    %c0_16 = arith.constant 0 : index
    %25 = vector.load %arg6[%c0_15, %c0_16] : memref<128x1xf32, #tpu.memory_space<vmem>>, vector<128x1xf32>
    tpu.vector_store %arg6[%c0_15, %c0_16], %24 {strides = array<i32>} : memref<128x1xf32, #tpu.memory_space<vmem>>, vector<128x1xf32>,
    return
  }
  func.func @transform_0(%arg0: i32) -> (i32, i32) {
    %c0_i32 = arith.constant 0 : i32
    %c0_i32_0 = arith.constant 0 : i32
    return %arg0, %c0_i32 : i32, i32
  }
  func.func @transform_1(%arg0: i32) -> (i32, i32) {
    %c0_i32 = arith.constant 0 : i32
    %c0_i32_0 = arith.constant 0 : i32
    %c0_i32_1 = arith.constant 0 : i32
    return %c0_i32, %c0_i32_0 : i32, i32
  }
  func.func @transform_2(%arg0: i32) -> (i32, i32) {
    %c0_i32 = arith.constant 0 : i32
    %c0_i32_0 = arith.constant 0 : i32
    %c0_i32_1 = arith.constant 0 : i32
    return %c0_i32, %c0_i32_0 : i32, i32
  }
  func.func @transform_3(%arg0: i32) -> (i32, i32) {
    %c0_i32 = arith.constant 0 : i32
    %c0_i32_0 = arith.constant 0 : i32
    %c0_i32_1 = arith.constant 0 : i32
    return %c0_i32, %c0_i32_0 : i32, i32
  }
  func.func @transform_4(%arg0: i32) -> (i32, i32) {
    %c0_i32 = arith.constant 0 : i32
    %c0_i32_0 = arith.constant 0 : i32
    %c0_i32_1 = arith.constant 0 : i32
    return %c0_i32, %c0_i32_0 : i32, i32
  }
  func.func @transform_5(%arg0: i32) -> (i32, i32) {
    %c0_i32 = arith.constant 0 : i32
    %c0_i32_0 = arith.constant 0 : i32
    return %arg0, %c0_i32 : i32, i32
  }
  func.func @transform_6(%arg0: i32) -> (i32, i32) {
    %c0_i32 = arith.constant 0 : i32
    %c0_i32_0 = arith.constant 0 : i32
    return %arg0, %c0_i32 : i32, i32
  }
}

</mosaic_0001>

<llo_original>
// kernel: mlp_base_forward.1
$region0: #{mlp_base_forward.1}
  #allocation0 [shape = 'u32[]', space=smem, size = 0x4, offset = 0x4, fixed_abs, tag = 'smem constant byte address 0x4 - core index']
  #allocation1 [shape = 'u32[144,128]{1,0:T(1,128)}', space=vmem, size = 0x12000, scoped, tag = 'internal scratch']
  #allocation2 [shape = 'f32[1,1]{1,0:T(1,128)S(6)}', space=smem, size = 0x200, scoped, tag = 'scoped memory for mlp_base_forward.1']
  %s0 = inlined_call_operand.vmem [shape: f32[256,32], index: 0, kind: input, shape index: {}]
  %s1 = inlined_call_operand.vmem [shape: bf16[32,128], index: 1, kind: input, shape index: {}]
  %s2 = inlined_call_operand.vmem [shape: bf16[128,128], index: 2, kind: input, shape index: {}]
  %s3 = inlined_call_operand.vmem [shape: f32[8,128], index: 3, kind: input, shape index: {}]
  %s4 = inlined_call_operand.<no memory space> [shape: f32[1,1], index: 4, kind: input, shape index: {}]
  %s5 = inlined_call_operand.vmem [shape: f32[256,1], index: 5, kind: output, shape index: {0}]
  %s6 = inlined_call_operand.vmem [shape: bf16[256,128], index: 6, kind: output, shape index: {1}]
  %7 = xla_tuple %s5, %s6
  %s8 = sld [smem:[#allocation0]]
  $region61: #{mlp_base_forward.1} parent=0
    _
  %s10 = ssub.s32 1, %s8
  %s11 = scalar_select 0, %s10, %s8
  %12 = sst [smem:[#allocation2]] %s4
  loop: start=0, step=1, limit=4
  $region2: #{mlp_base_forward.1} parent=0 // loop_pre_header
    _
  $region3: #{mlp_base_forward.1} parent=0 // loop_header
    %s14 = sphi 0, %s18
    %p15 = scmp.ge.s32.totalorder %s14, 4
    %s24 = sphi 0, %s26
    %s27 = sphi 0, %s24
    %s28 = sphi 0, %s27
    %s44 = sphi 0, %s28
    %s48 = sphi 0, %s48
    %s50 = sphi 0, %s48
    %s51 = sphi 0, %s50
    %s65 = sphi 0, %s51
    %s69 = sphi 0, %s69
    %s71 = sphi 0, %s69
    %s72 = sphi 0, %s71
    %s86 = sphi 0, %s72
    %s90 = sphi 0, %s90
    %s92 = sphi 0, %s90
    %s93 = sphi 0, %s92
    %s107 = sphi 0, %s93
    %s111 = sphi 0, %s111
    %s113 = sphi 0, %s111
    %s114 = sphi 0, %s113
    %s128 = sphi 0, %s114
    %s134 = sphi 0, %s136
    %s137 = sphi 0, %s134
    %s138 = sphi 0, %s137
    %s154 = sphi 0, %s138
    %s160 = sphi 0, %s162
    %s163 = sphi 0, %s160
    %s164 = sphi 0, %s163
    %s180 = sphi 0, %s164
  $region4: #{mlp_base_forward.1} parent=0 // loop_header_branch
    %17 = sbr.rel (%p15) target = $region8
  $region5: #{mlp_base_forward.1} parent=0 // loop_body
    %s19 = ssub.s32 %s14, 1
    %s20 = ssub.s32 %s14, 2
    %s21 = sadd.s32 %s14, 1
    %s22 = ssub.s32 %s14, %s21
    %p23 = scmp.eq.s32.totalorder %s22, 0
    %s25 = sadd.s32 %s24, 1
    %s26 = scalar_select %p23, %s24, %s25
    %p29 = pneg %p23
    %p30 = scmp.eq.s32.totalorder %s14, 1
    %p31 = por %p29, %p30
    %p32 = scmp.ne.s32.totalorder %s24, %s27
    %p33 = scmp.eq.s32.totalorder %s14, 0
    %p34 = por %p32, %p33
    %p35 = scmp.ne.s32.totalorder %s24, %s27
    %p36 = scmp.eq.s32.totalorder %s19, 1
    %p37 = por %p35, %p36
    %p38 = scmp.ne.s32.totalorder %s27, %s28
    %p39 = scmp.eq.s32.totalorder %s19, 0
    %p40 = por %p38, %p39
    %p41 = scmp.ne.s32.totalorder %s27, %s28
    %p42 = scmp.eq.s32.totalorder %s20, 1
    %p43 = por %p41, %p42
    %p45 = scmp.ne.s32.totalorder %s28, %s44
    %p46 = scmp.eq.s32.totalorder %s20, 0
    %p47 = por %p45, %p46
    %s49 = sadd.s32 %s48, 1
    %p52 = scmp.eq.s32.totalorder %s14, 1
    %p53 = scmp.ne.s32.totalorder %s48, %s50
    %p54 = scmp.eq.s32.totalorder %s14, 0
    %p55 = por %p53, %p54
    %p56 = scmp.ne.s32.totalorder %s48, %s50
    %p57 = scmp.eq.s32.totalorder %s19, 1
    %p58 = por %p56, %p57
    %p59 = scmp.ne.s32.totalorder %s50, %s51
    %p60 = scmp.eq.s32.totalorder %s19, 0
    %p61 = por %p59, %p60
    %p62 = scmp.ne.s32.totalorder %s50, %s51
    %p63 = scmp.eq.s32.totalorder %s20, 1
    %p64 = por %p62, %p63
    %p66 = scmp.ne.s32.totalorder %s51, %s65
    %p67 = scmp.eq.s32.totalorder %s20, 0
    %p68 = por %p66, %p67
    %s70 = sadd.s32 %s69, 1
    %p73 = scmp.eq.s32.totalorder %s14, 1
    %p74 = scmp.ne.s32.totalorder %s69, %s71
    %p75 = scmp.eq.s32.totalorder %s14, 0
    %p76 = por %p74, %p75
    %p77 = scmp.ne.s32.totalorder %s69, %s71
    %p78 = scmp.eq.s32.totalorder %s19, 1
    %p79 = por %p77, %p78
    %p80 = scmp.ne.s32.totalorder %s71, %s72
    %p81 = scmp.eq.s32.totalorder %s19, 0
    %p82 = por %p80, %p81
    %p83 = scmp.ne.s32.totalorder %s71, %s72
    %p84 = scmp.eq.s32.totalorder %s20, 1
    %p85 = por %p83, %p84
    %p87 = scmp.ne.s32.totalorder %s72, %s86
    %p88 = scmp.eq.s32.totalorder %s20, 0
    %p89 = por %p87, %p88
    %s91 = sadd.s32 %s90, 1
    %p94 = scmp.eq.s32.totalorder %s14, 1
    %p95 = scmp.ne.s32.totalorder %s90, %s92
    %p96 = scmp.eq.s32.totalorder %s14, 0
    %p97 = por %p95, %p96
    %p98 = scmp.ne.s32.totalorder %s90, %s92
    %p99 = scmp.eq.s32.totalorder %s19, 1
    %p100 = por %p98, %p99
    %p101 = scmp.ne.s32.totalorder %s92, %s93
    %p102 = scmp.eq.s32.totalorder %s19, 0
    %p103 = por %p101, %p102
    %p104 = scmp.ne.s32.totalorder %s92, %s93
    %p105 = scmp.eq.s32.totalorder %s20, 1
    %p106 = por %p104, %p105
    %p108 = scmp.ne.s32.totalorder %s93, %s107
    %p109 = scmp.eq.s32.totalorder %s20, 0
    %p110 = por %p108, %p109
    %s112 = sadd.s32 %s111, 1
    %p115 = scmp.eq.s32.totalorder %s14, 1
    %p116 = scmp.ne.s32.totalorder %s111, %s113
    %p117 = scmp.eq.s32.totalorder %s14, 0
    %p118 = por %p116, %p117
    %p119 = scmp.ne.s32.totalorder %s111, %s113
    %p120 = scmp.eq.s32.totalorder %s19, 1
    %p121 = por %p119, %p120
    %p122 = scmp.ne.s32.totalorder %s113, %s114
    %p123 = scmp.eq.s32.totalorder %s19, 0
    %p124 = por %p122, %p123
    %p125 = scmp.ne.s32.totalorder %s113, %s114
    %p126 = scmp.eq.s32.totalorder %s20, 1
    %p127 = por %p125, %p126
    %p129 = scmp.ne.s32.totalorder %s114, %s128
    %p130 = scmp.eq.s32.totalorder %s20, 0
    %p131 = por %p129, %p130
    %s132 = ssub.s32 %s14, %s21
    %p133 = scmp.eq.s32.totalorder %s132, 0
    %s135 = sadd.s32 %s134, 1
    %s136 = scalar_select %p133, %s134, %s135
    %p139 = pneg %p133
    %p140 = scmp.eq.s32.totalorder %s14, 1
    %p141 = por %p139, %p140
    %p142 = scmp.ne.s32.totalorder %s134, %s137
    %p143 = scmp.eq.s32.totalorder %s14, 0
    %p144 = por %p142, %p143
    %p145 = scmp.ne.s32.totalorder %s134, %s137
    %p146 = scmp.eq.s32.totalorder %s19, 1
    %p147 = por %p145, %p146
    %p148 = scmp.ne.s32.totalorder %s137, %s138
    %p149 = scmp.eq.s32.totalorder %s19, 0
    %p150 = por %p148, %p149
    %p151 = scmp.ne.s32.totalorder %s137, %s138
    %p152 = scmp.eq.s32.totalorder %s20, 1
    %p153 = por %p151, %p152
    %p155 = scmp.ne.s32.totalorder %s138, %s154
    %p156 = scmp.eq.s32.totalorder %s20, 0
    %p157 = por %p155, %p156
    %s158 = ssub.s32 %s14, %s21
    %p159 = scmp.eq.s32.totalorder %s158, 0
    %s161 = sadd.s32 %s160, 1
    %s162 = scalar_select %p159, %s160, %s161
    %p165 = pneg %p159
    %p166 = scmp.eq.s32.totalorder %s14, 1
    %p167 = por %p165, %p166
    %p168 = scmp.ne.s32.totalorder %s160, %s163
    %p169 = scmp.eq.s32.totalorder %s14, 0
    %p170 = por %p168, %p169
    %p171 = scmp.ne.s32.totalorder %s160, %s163
    %p172 = scmp.eq.s32.totalorder %s19, 1
    %p173 = por %p171, %p172
    %p174 = scmp.ne.s32.totalorder %s163, %s164
    %p175 = scmp.eq.s32.totalorder %s19, 0
    %p176 = por %p174, %p175
    %p177 = scmp.ne.s32.totalorder %s163, %s164
    %p178 = scmp.eq.s32.totalorder %s20, 1
    %p179 = por %p177, %p178
    %p181 = scmp.ne.s32.totalorder %s164, %s180
    %p182 = scmp.eq.s32.totalorder %s20, 0
    %p183 = por %p181, %p182
    %p184 = scmp.le.s32.totalorder 1, %s14
    %p185 = scmp.lt.s32.totalorder %s14, 3
    %p186 = pnand %p184, %p185
    %p187 = pneg %p186
    // Predicated region
    $region9: #{mlp_base_forward.1} parent=5 // pred_check
      _
    $region10: #{mlp_base_forward.1} parent=5 // pred_check_branch
      %189 = sbr.rel (%p186) target = $region12
    $region11: #{mlp_base_forward.1} parent=5 // pred_region
      %s190 = ssub.s32 %s14, 1
      // Predicated region
      $region13: #{mlp_base_forward.1} parent=11 // pred_check
        %p191 = pneg %p61
      $region14: #{mlp_base_forward.1} parent=11 // pred_check_branch
        %193 = sbr.rel (%p191) target = $region16
      $region15: #{mlp_base_forward.1} parent=11 // pred_region
        _
      $region16: #{mlp_base_forward.1} parent=11 // pred_fallthru
        _
      // Predicated region
      $region17: #{mlp_base_forward.1} parent=11 // pred_check
        %p194 = pneg %p82
      $region18: #{mlp_base_forward.1} parent=11 // pred_check_branch
        %196 = sbr.rel (%p194) target = $region20
      $region19: #{mlp_base_forward.1} parent=11 // pred_region
        _
      $region20: #{mlp_base_forward.1} parent=11 // pred_fallthru
        _
      // Predicated region
      $region21: #{mlp_base_forward.1} parent=11 // pred_check
        %p197 = pneg %p103
      $region22: #{mlp_base_forward.1} parent=11 // pred_check_branch
        %199 = sbr.rel (%p197) target = $region24
      $region23: #{mlp_base_forward.1} parent=11 // pred_region
        _
      $region24: #{mlp_base_forward.1} parent=11 // pred_fallthru
        _
      // Predicated region
      $region25: #{mlp_base_forward.1} parent=11 // pred_check
        %p200 = pneg %p124
      $region26: #{mlp_base_forward.1} parent=11 // pred_check_branch
        %202 = sbr.rel (%p200) target = $region28
      $region27: #{mlp_base_forward.1} parent=11 // pred_region
        _
      $region28: #{mlp_base_forward.1} parent=11 // pred_fallthru
        _
    $region12: #{mlp_base_forward.1} parent=5 // pred_fallthru
      _
    %p203 = scmp.lt.s32.totalorder %s14, 2
    // Predicated region
    $region29: #{mlp_base_forward.1} parent=5 // pred_check
      %p204 = pneg %p203
    $region30: #{mlp_base_forward.1} parent=5 // pred_check_branch
      %206 = sbr.rel (%p204) target = $region32
    $region31: #{mlp_base_forward.1} parent=5 // pred_region
      // Predicated region
      $region33: #{mlp_base_forward.1} parent=31 // pred_check
        %p207 = pneg %p34
      $region34: #{mlp_base_forward.1} parent=31 // pred_check_branch
        %209 = sbr.rel (%p207) target = $region36
      $region35: #{mlp_base_forward.1} parent=31 // pred_region
        %s210 = smul.u32 16, %s14
        %p211 = scmp.lt.s32.totalorder %s210, 31
        %s212 = scalar_select %p211, %s210, 31
        %s213 = smul.addr %s212, 8
        %s214 = scalar_lea.vmem %s0, %s213
        %s215 = smul.u32 16, %s14
      $region36: #{mlp_base_forward.1} parent=31 // pred_fallthru
        _
    $region32: #{mlp_base_forward.1} parent=5 // pred_fallthru
      _
    %p216 = scmp.le.s32.totalorder 1, %s14
    %p217 = scmp.lt.s32.totalorder %s14, 3
    %p218 = pnand %p216, %p217
    %p219 = pneg %p218
    // Predicated region
    $region37: #{mlp_base_forward.1} parent=5 // pred_check
      _
    $region38: #{mlp_base_forward.1} parent=5 // pred_check_branch
      %221 = sbr.rel (%p218) target = $region40
    $region39: #{mlp_base_forward.1} parent=5 // pred_region
      %s222 = ssub.s32 %s14, 1
      %s223 = smul.u32 16, %s19
      %p224 = scmp.lt.s32.totalorder %s223, 31
      %s225 = scalar_select %p224, %s223, 31
      %s226 = smul.addr %s225, 8
      %s227 = scalar_lea.vmem %s0, %s226
      %p228 = pneg %p40
      %p229 = pneg %p37
      %p230 = pneg %p61
      %p231 = pneg %p58
      %p232 = pneg %p82
      %p233 = pneg %p79
      %p234 = pneg %p103
      %p235 = pneg %p100
      %p236 = pneg %p124
      %p237 = pneg %p121
      %p238 = pneg %p150
      %p239 = pneg %p147
      %s240 = smul.u32 16, %s19
      %p241 = scmp.lt.s32.totalorder %s240, 31
      %s242 = scalar_select %p241, %s240, 31
      %s243 = smul.addr %s242, 8
      %s244 = scalar_lea.vmem %s5, %s243
      %p245 = pneg %p176
      %p246 = pneg %p173
      %s247 = smul.u32 16, %s19
      %p248 = scmp.lt.s32.totalorder %s247, 31
      %s249 = scalar_select %p248, %s247, 31
      %s250 = smul.addr %s249, 4
      %s251 = scalar_lea.vmem %s6, %s250
      %s252 = smul.u32 16, %s19
      %p253 = scmp.lt.s32.totalorder %s252, 31
      %s254 = scalar_select %p253, %s252, 31
      %s255 = smul.addr %s254, 8
      %s256 = scalar_lea.vmem %s0, %s255
      %s257 = smul.u32 16, %s19
      %s258 = smul.u32 16, %s19
      %p259 = scmp.lt.s32.totalorder %s258, 31
      %s260 = scalar_select %p259, %s258, 31
      %s261 = smul.addr %s260, 8
      %s262 = scalar_lea.vmem %s5, %s261
      %s263 = smul.u32 16, %s19
      %s264 = smul.u32 16, %s19
      %p265 = scmp.lt.s32.totalorder %s264, 31
      %s266 = scalar_select %p265, %s264, 31
      %s267 = smul.addr %s266, 4
      %s268 = scalar_lea.vmem %s6, %s267
      %s269 = smul.u32 16, %s19
      %v271 = vld [vmem:[%s256] sm:$0xff]
      %v272 = vld [vmem:[%s256 + $0x8] sm:$0xff]
      %v273 = vld [vmem:[%s256 + $0x10] sm:$0xff]
      %v274 = vld [vmem:[%s256 + $0x18] sm:$0xff]
      %v275 = vld [vmem:[%s256 + $0x20] sm:$0xff]
      %v276 = vld [vmem:[%s256 + $0x28] sm:$0xff]
      %v277 = vld [vmem:[%s256 + $0x30] sm:$0xff]
      %v278 = vld [vmem:[%s256 + $0x38] sm:$0xff]
      %v279 = vld [vmem:[%s256 + $0x40] sm:$0xff]
      %v280 = vld [vmem:[%s256 + $0x48] sm:$0xff]
      %v281 = vld [vmem:[%s256 + $0x50] sm:$0xff]
      %v282 = vld [vmem:[%s256 + $0x58] sm:$0xff]
      %v283 = vld [vmem:[%s256 + $0x60] sm:$0xff]
      %v284 = vld [vmem:[%s256 + $0x68] sm:$0xff]
      %v285 = vld [vmem:[%s256 + $0x70] sm:$0xff]
      %v286 = vld [vmem:[%s256 + $0x78] sm:$0xff]
      %v287 = vpack.c.bf16 %v272, %v271
      %v288 = vpack.c.bf16 %v274, %v273
      %v289 = vpack.c.bf16 %v276, %v275
      %v290 = vpack.c.bf16 %v278, %v277
      %v291 = vpack.c.bf16 %v280, %v279
      %v292 = vpack.c.bf16 %v282, %v281
      %v293 = vpack.c.bf16 %v284, %v283
      %v294 = vpack.c.bf16 %v286, %v285
      %v295 = vld [vmem:[%s3] sm:$0x1]
      %v296 = vld [vmem:[%s3 + $0x1] sm:$0x1]
      %v297 = vld [vmem:[%s3 + $0x2] sm:$0x1]
      %v298 = vld [vmem:[%s1] sm:$0xf]
      %v299 = vld [vmem:[%s1 + $0x4] sm:$0xf]
      %v300 = vld [vmem:[%s1 + $0x8] sm:$0xf]
      %v301 = vld [vmem:[%s1 + $0xc] sm:$0xf]
      %v302 = vlaneseq
      %v303 = vshrl.u32 %v302, 7
      %v304 = vsub.s32 0, %v303
      %v305 = vrot.slane %v295, %v304
      %v310 = vunpack.c.l.b16 %v298
      %v311 = vunpack.c.l.b16 %v299
      %v312 = vunpack.c.l.b16 %v300
      %v313 = vunpack.c.l.b16 %v301
      %v314 = vpack.c.b16 %v311, %v310
      %v315 = vpack.c.b16 %v313, %v312
      %vm318 = vcmask 261120
      %v320 = vsel %vm318, %v287, 0
      %v323 = vsel %vm318, %v288, 0
      %v326 = vsel %vm318, %v289, 0
      %v329 = vsel %vm318, %v290, 0
      %v332 = vsel %vm318, %v291, 0
      %v335 = vsel %vm318, %v292, 0
      %v338 = vsel %vm318, %v293, 0
      %v341 = vsel %vm318, %v294, 0
      %343 = vmatprep.subr.bf16.mxu0 0
      %344 = vmatpush1.bf16.msra.mxu0 %v314
      %345 = vmatprep.subr.bf16.mxu0 0
      %346 = vmatpush1.bf16.msra.mxu0 %v315
      %347 = vmatprep.subr.bf16.mxu0 0
      %348 = vmatpush1.bf16.msra.mxu0 0
      %349 = vmatprep.subr.bf16.mxu0 0
      %350 = vmatpush1.bf16.msra.mxu0 0
      %351 = vmatprep.subr.bf16.mxu0 0
      %352 = vmatpush1.bf16.msra.mxu0 0
      %353 = vmatprep.subr.bf16.mxu0 0
      %354 = vmatpush1.bf16.msra.mxu0 0
      %355 = vmatprep.subr.bf16.mxu0 0
      %356 = vmatpush1.bf16.msra.mxu0 0
      %357 = vmatprep.subr.bf16.mxu0 0
      %358 = vmatpush1.bf16.msra.mxu0 0
      %359 = vmatprep.subr.bf16.mxu0 0
      %360 = vmatpush1.bf16.msra.mxu0 0
      %361 = vmatprep.subr.bf16.mxu0 0
      %362 = vmatpush1.bf16.msra.mxu0 0
      %363 = vmatprep.subr.bf16.mxu0 0
      %364 = vmatpush1.bf16.msra.mxu0 0
      %365 = vmatprep.subr.bf16.mxu0 0
      %366 = vmatpush1.bf16.msra.mxu0 0
      %367 = vmatprep.subr.bf16.mxu0 0
      %368 = vmatpush1.bf16.msra.mxu0 0
      %369 = vmatprep.subr.bf16.mxu0 0
      %370 = vmatpush1.bf16.msra.mxu0 0
      %371 = vmatprep.subr.bf16.mxu0 0
      %372 = vmatpush1.bf16.msra.mxu0 0
      %373 = vmatprep.subr.bf16.mxu0 0
      %374 = vmatpush1.bf16.msra.mxu0 0
      %375 = vmatprep.mubr.bf16.mxu0 0
      %376 = vmatmul.mubr.bf16.gmra.mrb[0].mxu0 %v320
      %v377 = vpop.f32.mrb[0].mxu0
      %v378 = vadd.f32 %v305, %v377
      %v379 = vpop.f32.mrb[0].mxu0
      %v380 = vpop.f32.mrb[0].mxu0
      %v381 = vadd.f32 %v305, %v380
      %v382 = vpop.f32.mrb[0].mxu0
      %383 = vmatprep.mubr.bf16.mxu0 0
      %384 = vmatmul.mubr.bf16.gmra.mrb[0].mxu0 %v323
      %v385 = vpop.f32.mrb[0].mxu0
      %v386 = vadd.f32 %v305, %v385
      %v387 = vpop.f32.mrb[0].mxu0
      %v388 = vpop.f32.mrb[0].mxu0
      %v389 = vadd.f32 %v305, %v388
      %v390 = vpop.f32.mrb[0].mxu0
      %391 = vmatprep.mubr.bf16.mxu0 0
      %392 = vmatmul.mubr.bf16.gmra.mrb[0].mxu0 %v326
      %v393 = vpop.f32.mrb[0].mxu0
      %v394 = vadd.f32 %v305, %v393
      %v395 = vpop.f32.mrb[0].mxu0
      %v396 = vpop.f32.mrb[0].mxu0
      %v397 = vadd.f32 %v305, %v396
      %v398 = vpop.f32.mrb[0].mxu0
      %399 = vmatprep.mubr.bf16.mxu0 0
      %400 = vmatmul.mubr.bf16.gmra.mrb[0].mxu0 %v329
      %v401 = vpop.f32.mrb[0].mxu0
      %v402 = vadd.f32 %v305, %v401
      %v403 = vpop.f32.mrb[0].mxu0
      %v404 = vpop.f32.mrb[0].mxu0
      %v405 = vadd.f32 %v305, %v404
      %v406 = vpop.f32.mrb[0].mxu0
      %407 = vmatprep.mubr.bf16.mxu0 0
      %408 = vmatmul.mubr.bf16.gmra.mrb[0].mxu0 %v332
      %v409 = vpop.f32.mrb[0].mxu0
      %v410 = vadd.f32 %v305, %v409
      %v411 = vpop.f32.mrb[0].mxu0
      %v412 = vpop.f32.mrb[0].mxu0
      %v413 = vadd.f32 %v305, %v412
      %v414 = vpop.f32.mrb[0].mxu0
      %415 = vmatprep.mubr.bf16.mxu0 0
      %416 = vmatmul.mubr.bf16.gmra.mrb[0].mxu0 %v335
      %v417 = vpop.f32.mrb[0].mxu0
      %v418 = vadd.f32 %v305, %v417
      %v419 = vpop.f32.mrb[0].mxu0
      %v420 = vpop.f32.mrb[0].mxu0
      %v421 = vadd.f32 %v305, %v420
      %v422 = vpop.f32.mrb[0].mxu0
      %423 = vmatprep.mubr.bf16.mxu0 0
      %424 = vmatmul.mubr.bf16.gmra.mrb[0].mxu0 %v338
      %v425 = vpop.f32.mrb[0].mxu0
      %v426 = vadd.f32 %v305, %v425
      %v427 = vpop.f32.mrb[0].mxu0
      %v428 = vpop.f32.mrb[0].mxu0
      %v429 = vadd.f32 %v305, %v428
      %v430 = vpop.f32.mrb[0].mxu0
      %431 = vmatprep.mubr.bf16.mxu0 0
      %432 = vmatmul.mubr.bf16.gmra.mrb[0].mxu0 %v341
      %v433 = vpop.f32.mrb[0].mxu0
      %v434 = vadd.f32 %v305, %v433
      %v435 = vpop.f32.mrb[0].mxu0
      %v436 = vpop.f32.mrb[0].mxu0
      %v437 = vadd.f32 %v305, %v436
      %v438 = vpop.f32.mrb[0].mxu0
      %439 = vdwg.mxu0
      %v440 = vtanh.pop %v378
      %v441 = vtanh.pop %v381
      %v442 = vtanh.pop %v386
      %v443 = vtanh.pop %v389
      %v444 = vtanh.pop %v394
      %v445 = vtanh.pop %v397
      %v446 = vtanh.pop %v402
      %v447 = vtanh.pop %v405
      %v448 = vtanh.pop %v410
      %v449 = vtanh.pop %v413
      %v450 = vtanh.pop %v418
      %v451 = vtanh.pop %v421
      %v452 = vtanh.pop %v426
      %v453 = vtanh.pop %v429
      %v454 = vtanh.pop %v434
      %v455 = vtanh.pop %v437
      %v456 = vpack.c.bf16 %v441, %v440
      %v457 = vpack.c.bf16 %v443, %v442
      %v458 = vpack.c.bf16 %v445, %v444
      %v459 = vpack.c.bf16 %v447, %v446
      %v460 = vpack.c.bf16 %v449, %v448
      %v461 = vpack.c.bf16 %v451, %v450
      %v462 = vpack.c.bf16 %v453, %v452
      %v463 = vpack.c.bf16 %v455, %v454
      %v464 = vld [vmem:[%s2] sm:$0xf]
      %v465 = vld [vmem:[%s2 + $0x4] sm:$0xf]
      %v466 = vld [vmem:[%s2 + $0x8] sm:$0xf]
      %v467 = vld [vmem:[%s2 + $0xc] sm:$0xf]
      %v468 = vld [vmem:[%s2 + $0x10] sm:$0xf]
      %v469 = vld [vmem:[%s2 + $0x14] sm:$0xf]
      %v470 = vld [vmem:[%s2 + $0x18] sm:$0xf]
      %v471 = vld [vmem:[%s2 + $0x1c] sm:$0xf]
      %v472 = vld [vmem:[%s2 + $0x20] sm:$0xf]
      %v473 = vld [vmem:[%s2 + $0x24] sm:$0xf]
      %v474 = vld [vmem:[%s2 + $0x28] sm:$0xf]
      %v475 = vld [vmem:[%s2 + $0x2c] sm:$0xf]
      %v476 = vld [vmem:[%s2 + $0x30] sm:$0xf]
      %v477 = vld [vmem:[%s2 + $0x34] sm:$0xf]
      %v478 = vld [vmem:[%s2 + $0x38] sm:$0xf]
      %v479 = vld [vmem:[%s2 + $0x3c] sm:$0xf]
      %v480 = vlaneseq
      %v481 = vshrl.u32 %v480, 7
      %v482 = vsub.s32 0, %v481
      %v483 = vrot.slane %v296, %v482
      %v500 = vunpack.c.l.b16 %v464
      %v501 = vunpack.c.l.b16 %v465
      %v502 = vunpack.c.l.b16 %v466
      %v503 = vunpack.c.l.b16 %v467
      %v504 = vunpack.c.l.b16 %v468
      %v505 = vunpack.c.l.b16 %v469
      %v506 = vunpack.c.l.b16 %v470
      %v507 = vunpack.c.l.b16 %v471
      %v508 = vunpack.c.l.b16 %v472
      %v509 = vunpack.c.l.b16 %v473
      %v510 = vunpack.c.l.b16 %v474
      %v511 = vunpack.c.l.b16 %v475
      %v512 = vunpack.c.l.b16 %v476
      %v513 = vunpack.c.l.b16 %v477
      %v514 = vunpack.c.l.b16 %v478
      %v515 = vunpack.c.l.b16 %v479
      %v516 = vpack.c.b16 %v501, %v500
      %v517 = vpack.c.b16 %v503, %v502
      %v518 = vpack.c.b16 %v505, %v504
      %v519 = vpack.c.b16 %v507, %v506
      %v520 = vpack.c.b16 %v509, %v508
      %v521 = vpack.c.b16 %v511, %v510
      %v522 = vpack.c.b16 %v513, %v512
      %v523 = vpack.c.b16 %v515, %v514
      %532 = vmatprep.subr.bf16.mxu0 0
      %533 = vmatpush1.bf16.msra.mxu0 %v516
      %534 = vmatprep.subr.bf16.mxu0 0
      %535 = vmatpush1.bf16.msra.mxu0 %v517
      %536 = vmatprep.subr.bf16.mxu0 0
      %537 = vmatpush1.bf16.msra.mxu0 %v518
      %538 = vmatprep.subr.bf16.mxu0 0
      %539 = vmatpush1.bf16.msra.mxu0 %v519
      %540 = vmatprep.subr.bf16.mxu0 0
      %541 = vmatpush1.bf16.msra.mxu0 %v520
      %542 = vmatprep.subr.bf16.mxu0 0
      %543 = vmatpush1.bf16.msra.mxu0 %v521
      %544 = vmatprep.subr.bf16.mxu0 0
      %545 = vmatpush1.bf16.msra.mxu0 %v522
      %546 = vmatprep.subr.bf16.mxu0 0
      %547 = vmatpush1.bf16.msra.mxu0 %v523
      %548 = vmatprep.subr.bf16.mxu0 0
      %549 = vmatpush1.bf16.msra.mxu0 0
      %550 = vmatprep.subr.bf16.mxu0 0
      %551 = vmatpush1.bf16.msra.mxu0 0
      %552 = vmatprep.subr.bf16.mxu0 0
      %553 = vmatpush1.bf16.msra.mxu0 0
      %554 = vmatprep.subr.bf16.mxu0 0
      %555 = vmatpush1.bf16.msra.mxu0 0
      %556 = vmatprep.subr.bf16.mxu0 0
      %557 = vmatpush1.bf16.msra.mxu0 0
      %558 = vmatprep.subr.bf16.mxu0 0
      %559 = vmatpush1.bf16.msra.mxu0 0
      %560 = vmatprep.subr.bf16.mxu0 0
      %561 = vmatpush1.bf16.msra.mxu0 0
      %562 = vmatprep.subr.bf16.mxu0 0
      %563 = vmatpush1.bf16.msra.mxu0 0
      %564 = vmatprep.mubr.bf16.mxu0 0
      %565 = vmatmul.mubr.bf16.gmra.mrb[0].mxu0 %v456
      %v566 = vpop.f32.mrb[0].mxu0
      %v567 = vadd.f32 %v483, %v566
      %v568 = vpop.f32.mrb[0].mxu0
      %v569 = vpop.f32.mrb[0].mxu0
      %v570 = vadd.f32 %v483, %v569
      %v571 = vpop.f32.mrb[0].mxu0
      %572 = vmatprep.mubr.bf16.mxu0 0
      %573 = vmatmul.mubr.bf16.gmra.mrb[0].mxu0 %v457
      %v574 = vpop.f32.mrb[0].mxu0
      %v575 = vadd.f32 %v483, %v574
      %v576 = vpop.f32.mrb[0].mxu0
      %v577 = vpop.f32.mrb[0].mxu0
      %v578 = vadd.f32 %v483, %v577
      %v579 = vpop.f32.mrb[0].mxu0
      %580 = vmatprep.mubr.bf16.mxu0 0
      %581 = vmatmul.mubr.bf16.gmra.mrb[0].mxu0 %v458
      %v582 = vpop.f32.mrb[0].mxu0
      %v583 = vadd.f32 %v483, %v582
      %v584 = vpop.f32.mrb[0].mxu0
      %v585 = vpop.f32.mrb[0].mxu0
      %v586 = vadd.f32 %v483, %v585
      %v587 = vpop.f32.mrb[0].mxu0
      %588 = vmatprep.mubr.bf16.mxu0 0
      %589 = vmatmul.mubr.bf16.gmra.mrb[0].mxu0 %v459
      %v590 = vpop.f32.mrb[0].mxu0
      %v591 = vadd.f32 %v483, %v590
      %v592 = vpop.f32.mrb[0].mxu0
      %v593 = vpop.f32.mrb[0].mxu0
      %v594 = vadd.f32 %v483, %v593
      %v595 = vpop.f32.mrb[0].mxu0
      %596 = vmatprep.mubr.bf16.mxu0 0
      %597 = vmatmul.mubr.bf16.gmra.mrb[0].mxu0 %v460
      %v598 = vpop.f32.mrb[0].mxu0
      %v599 = vadd.f32 %v483, %v598
      %v600 = vpop.f32.mrb[0].mxu0
      %v601 = vpop.f32.mrb[0].mxu0
      %v602 = vadd.f32 %v483, %v601
      %v603 = vpop.f32.mrb[0].mxu0
      %604 = vmatprep.mubr.bf16.mxu0 0
      %605 = vmatmul.mubr.bf16.gmra.mrb[0].mxu0 %v461
      %v606 = vpop.f32.mrb[0].mxu0
      %v607 = vadd.f32 %v483, %v606
      %v608 = vpop.f32.mrb[0].mxu0
      %v609 = vpop.f32.mrb[0].mxu0
      %v610 = vadd.f32 %v483, %v609
      %v611 = vpop.f32.mrb[0].mxu0
      %612 = vmatprep.mubr.bf16.mxu0 0
      %613 = vmatmul.mubr.bf16.gmra.mrb[0].mxu0 %v462
      %v614 = vpop.f32.mrb[0].mxu0
      %v615 = vadd.f32 %v483, %v614
      %v616 = vpop.f32.mrb[0].mxu0
      %v617 = vpop.f32.mrb[0].mxu0
      %v618 = vadd.f32 %v483, %v617
      %v619 = vpop.f32.mrb[0].mxu0
      %620 = vmatprep.mubr.bf16.mxu0 0
      %621 = vmatmul.mubr.bf16.gmra.mrb[0].mxu0 %v463
      %v622 = vpop.f32.mrb[0].mxu0
      %v623 = vadd.f32 %v483, %v622
      %v624 = vpop.f32.mrb[0].mxu0
      %v625 = vpop.f32.mrb[0].mxu0
      %v626 = vadd.f32 %v483, %v625
      %v627 = vpop.f32.mrb[0].mxu0
      %628 = vdwg.mxu0
      %v629 = vtanh.pop %v567
      %v630 = vtanh.pop %v570
      %v631 = vtanh.pop %v575
      %v632 = vtanh.pop %v578
      %v633 = vtanh.pop %v583
      %v634 = vtanh.pop %v586
      %v635 = vtanh.pop %v591
      %v636 = vtanh.pop %v594
      %v637 = vtanh.pop %v599
      %v638 = vtanh.pop %v602
      %v639 = vtanh.pop %v607
      %v640 = vtanh.pop %v610
      %v641 = vtanh.pop %v615
      %v642 = vtanh.pop %v618
      %v643 = vtanh.pop %v623
      %v644 = vtanh.pop %v626
      %v645 = vpack.c.bf16 %v630, %v629
      %v646 = vpack.c.bf16 %v632, %v631
      %v647 = vpack.c.bf16 %v634, %v633
      %v648 = vpack.c.bf16 %v636, %v635
      %v649 = vpack.c.bf16 %v638, %v637
      %v650 = vpack.c.bf16 %v640, %v639
      %v651 = vpack.c.bf16 %v642, %v641
      %v652 = vpack.c.bf16 %v644, %v643
      %v661 = vunpack.c.l.b16 %v645
      %v662 = vunpack.c.h.b16 %v645
      %v663 = vunpack.c.l.b16 %v646
      %v664 = vunpack.c.h.b16 %v646
      %v665 = vunpack.c.l.b16 %v647
      %v666 = vunpack.c.h.b16 %v647
      %v667 = vunpack.c.l.b16 %v648
      %v668 = vunpack.c.h.b16 %v648
      %v669 = vunpack.c.l.b16 %v649
      %v670 = vunpack.c.h.b16 %v649
      %v671 = vunpack.c.l.b16 %v650
      %v672 = vunpack.c.h.b16 %v650
      %v673 = vunpack.c.l.b16 %v651
      %v674 = vunpack.c.h.b16 %v651
      %v675 = vunpack.c.l.b16 %v652
      %v676 = vunpack.c.h.b16 %v652
      %v677 = vpack.c.b16 %v661, %v661
      %v678 = vpack.c.b16 %v662, %v662
      %v679 = vpack.c.b16 %v663, %v663
      %v680 = vpack.c.b16 %v664, %v664
      %v681 = vpack.c.b16 %v665, %v665
      %v682 = vpack.c.b16 %v666, %v666
      %v683 = vpack.c.b16 %v667, %v667
      %v684 = vpack.c.b16 %v668, %v668
      %v685 = vpack.c.b16 %v669, %v669
      %v686 = vpack.c.b16 %v670, %v670
      %v687 = vpack.c.b16 %v671, %v671
      %v688 = vpack.c.b16 %v672, %v672
      %v689 = vpack.c.b16 %v673, %v673
      %v690 = vpack.c.b16 %v674, %v674
      %v691 = vpack.c.b16 %v675, %v675
      %v692 = vpack.c.b16 %v676, %v676
      %709 = vst [vmem:[%s268] sm:$0xf] %v677
      %710 = vst [vmem:[%s268 + $0x4] sm:$0xf] %v678
      %711 = vst [vmem:[%s268 + $0x8] sm:$0xf] %v679
      %712 = vst [vmem:[%s268 + $0xc] sm:$0xf] %v680
      %713 = vst [vmem:[%s268 + $0x10] sm:$0xf] %v681
      %714 = vst [vmem:[%s268 + $0x14] sm:$0xf] %v682
      %715 = vst [vmem:[%s268 + $0x18] sm:$0xf] %v683
      %716 = vst [vmem:[%s268 + $0x1c] sm:$0xf] %v684
      %717 = vst [vmem:[%s268 + $0x20] sm:$0xf] %v685
      %718 = vst [vmem:[%s268 + $0x24] sm:$0xf] %v686
      %719 = vst [vmem:[%s268 + $0x28] sm:$0xf] %v687
      %720 = vst [vmem:[%s268 + $0x2c] sm:$0xf] %v688
      %721 = vst [vmem:[%s268 + $0x30] sm:$0xf] %v689
      %722 = vst [vmem:[%s268 + $0x34] sm:$0xf] %v690
      %723 = vst [vmem:[%s268 + $0x38] sm:$0xf] %v691
      %724 = vst [vmem:[%s268 + $0x3c] sm:$0xf] %v692
      %v725 = vlaneseq
      %v726 = vshrl.u32 %v725, 7
      %v727 = vsub.s32 0, %v726
      %v728 = vrot.slane %v297, %v727
      %v729 = vmul.f32 %v629, %v728
      %v730 = vmul.f32 %v630, %v728
      %v731 = vmul.f32 %v631, %v728
      %v732 = vmul.f32 %v632, %v728
      %v733 = vmul.f32 %v633, %v728
      %v734 = vmul.f32 %v634, %v728
      %v735 = vmul.f32 %v635, %v728
      %v736 = vmul.f32 %v636, %v728
      %v737 = vmul.f32 %v637, %v728
      %v738 = vmul.f32 %v638, %v728
      %v739 = vmul.f32 %v639, %v728
      %v740 = vmul.f32 %v640, %v728
      %v741 = vmul.f32 %v641, %v728
      %v742 = vmul.f32 %v642, %v728
      %v743 = vmul.f32 %v643, %v728
      %v744 = vmul.f32 %v644, %v728
      %745 = vadd.xlane.f32.xlu0 %v729
      %v746 = vpop.xlane.xlu0 %745
      %747 = vadd.xlane.f32.xlu0 %v730
      %v748 = vpop.xlane.xlu0 %747
      %749 = vadd.xlane.f32.xlu0 %v731
      %v750 = vpop.xlane.xlu0 %749
      %751 = vadd.xlane.f32.xlu0 %v732
      %v752 = vpop.xlane.xlu0 %751
      %753 = vadd.xlane.f32.xlu0 %v733
      %v754 = vpop.xlane.xlu0 %753
      %755 = vadd.xlane.f32.xlu0 %v734
      %v756 = vpop.xlane.xlu0 %755
      %757 = vadd.xlane.f32.xlu0 %v735
      %v758 = vpop.xlane.xlu0 %757
      %759 = vadd.xlane.f32.xlu0 %v736
      %v760 = vpop.xlane.xlu0 %759
      %761 = vadd.xlane.f32.xlu0 %v737
      %v762 = vpop.xlane.xlu0 %761
      %763 = vadd.xlane.f32.xlu0 %v738
      %v764 = vpop.xlane.xlu0 %763
      %765 = vadd.xlane.f32.xlu0 %v739
      %v766 = vpop.xlane.xlu0 %765
      %767 = vadd.xlane.f32.xlu0 %v740
      %v768 = vpop.xlane.xlu0 %767
      %769 = vadd.xlane.f32.xlu0 %v741
      %v770 = vpop.xlane.xlu0 %769
      %771 = vadd.xlane.f32.xlu0 %v742
      %v772 = vpop.xlane.xlu0 %771
      %773 = vadd.xlane.f32.xlu0 %v743
      %v774 = vpop.xlane.xlu0 %773
      %775 = vadd.xlane.f32.xlu0 %v744
      %v776 = vpop.xlane.xlu0 %775
      %s777 = sld [smem:[#allocation2]]
      %v778 = vstv %s777
      %v779 = vadd.f32 %v746, %v778
      %v780 = vadd.f32 %v748, %v778
      %v781 = vadd.f32 %v750, %v778
      %v782 = vadd.f32 %v752, %v778
      %v783 = vadd.f32 %v754, %v778
      %v784 = vadd.f32 %v756, %v778
      %v785 = vadd.f32 %v758, %v778
      %v786 = vadd.f32 %v760, %v778
      %v787 = vadd.f32 %v762, %v778
      %v788 = vadd.f32 %v764, %v778
      %v789 = vadd.f32 %v766, %v778
      %v790 = vadd.f32 %v768, %v778
      %v791 = vadd.f32 %v770, %v778
      %v792 = vadd.f32 %v772, %v778
      %v793 = vadd.f32 %v774, %v778
      %v794 = vadd.f32 %v776, %v778
      %vm795 = vcmask 7168
      %796 = vst.msk [vmem:[%s262] sm:$0xff] %vm795, %v779
      %797 = vst.msk [vmem:[%s262 + $0x8] sm:$0xff] %vm795, %v780
      %798 = vst.msk [vmem:[%s262 + $0x10] sm:$0xff] %vm795, %v781
      %799 = vst.msk [vmem:[%s262 + $0x18] sm:$0xff] %vm795, %v782
      %800 = vst.msk [vmem:[%s262 + $0x20] sm:$0xff] %vm795, %v783
      %801 = vst.msk [vmem:[%s262 + $0x28] sm:$0xff] %vm795, %v784
      %802 = vst.msk [vmem:[%s262 + $0x30] sm:$0xff] %vm795, %v785
      %803 = vst.msk [vmem:[%s262 + $0x38] sm:$0xff] %vm795, %v786
      %804 = vst.msk [vmem:[%s262 + $0x40] sm:$0xff] %vm795, %v787
      %805 = vst.msk [vmem:[%s262 + $0x48] sm:$0xff] %vm795, %v788
      %806 = vst.msk [vmem:[%s262 + $0x50] sm:$0xff] %vm795, %v789
      %807 = vst.msk [vmem:[%s262 + $0x58] sm:$0xff] %vm795, %v790
      %808 = vst.msk [vmem:[%s262 + $0x60] sm:$0xff] %vm795, %v791
      %809 = vst.msk [vmem:[%s262 + $0x68] sm:$0xff] %vm795, %v792
      %810 = vst.msk [vmem:[%s262 + $0x70] sm:$0xff] %vm795, %v793
      %811 = vst.msk [vmem:[%s262 + $0x78] sm:$0xff] %vm795, %v794
      %s812 = smul.u32 16, %s19
      %p813 = scmp.lt.s32.totalorder %s812, 31
      %s814 = scalar_select %p813, %s812, 31
      %s815 = smul.addr %s814, 8
      %s816 = scalar_lea.vmem %s5, %s815
      %s817 = smul.u32 16, %s19
      %p818 = scmp.lt.s32.totalorder %s817, 31
      %s819 = scalar_select %p818, %s817, 31
      %s820 = smul.addr %s819, 4
      %s821 = scalar_lea.vmem %s6, %s820
      // Predicated region
      $region41: #{mlp_base_forward.1} parent=39 // pred_check
        %p822 = pneg %p147
      $region42: #{mlp_base_forward.1} parent=39 // pred_check_branch
        %824 = sbr.rel (%p822) target = $region44
      $region43: #{mlp_base_forward.1} parent=39 // pred_region
        %s825 = smul.u32 16, %s19
      $region44: #{mlp_base_forward.1} parent=39 // pred_fallthru
        _
      // Predicated region
      $region45: #{mlp_base_forward.1} parent=39 // pred_check
        %p826 = pneg %p173
      $region46: #{mlp_base_forward.1} parent=39 // pred_check_branch
        %828 = sbr.rel (%p826) target = $region48
      $region47: #{mlp_base_forward.1} parent=39 // pred_region
        %s829 = smul.u32 16, %s19
      $region48: #{mlp_base_forward.1} parent=39 // pred_fallthru
        _
    $region40: #{mlp_base_forward.1} parent=5 // pred_fallthru
      _
    %p830 = scmp.le.s32.totalorder 2, %s14
    // Predicated region
    $region49: #{mlp_base_forward.1} parent=5 // pred_check
      %p831 = pneg %p830
    $region50: #{mlp_base_forward.1} parent=5 // pred_check_branch
      %833 = sbr.rel (%p831) target = $region52
    $region51: #{mlp_base_forward.1} parent=5 // pred_region
      %s834 = ssub.s32 %s14, 2
      // Predicated region
      $region53: #{mlp_base_forward.1} parent=51 // pred_check
        %p835 = pneg %p153
      $region54: #{mlp_base_forward.1} parent=51 // pred_check_branch
        %837 = sbr.rel (%p835) target = $region56
      $region55: #{mlp_base_forward.1} parent=51 // pred_region
        %s838 = smul.u32 16, %s20
        %p839 = scmp.lt.s32.totalorder %s838, 31
        %s840 = scalar_select %p839, %s838, 31
        %s841 = smul.addr %s840, 8
        %s842 = scalar_lea.vmem %s5, %s841
      $region56: #{mlp_base_forward.1} parent=51 // pred_fallthru
        _
      // Predicated region
      $region57: #{mlp_base_forward.1} parent=51 // pred_check
        %p843 = pneg %p179
      $region58: #{mlp_base_forward.1} parent=51 // pred_check_branch
        %845 = sbr.rel (%p843) target = $region60
      $region59: #{mlp_base_forward.1} parent=51 // pred_region
        %s846 = smul.u32 16, %s20
        %p847 = scmp.lt.s32.totalorder %s846, 31
        %s848 = scalar_select %p847, %s846, 31
        %s849 = smul.addr %s848, 4
        %s850 = scalar_lea.vmem %s6, %s849
      $region60: #{mlp_base_forward.1} parent=51 // pred_fallthru
        _
    $region52: #{mlp_base_forward.1} parent=5 // pred_fallthru
      _
  $region6: #{mlp_base_forward.1} parent=0 // loop_footer
    %s18 = sadd.s32 1, %s14
  $region7: #{mlp_base_forward.1} parent=0 // loop_footer_branch
    %13 = sbr.rel target = $region3
  $region8: #{mlp_base_forward.1} parent=0 // loop_exit
    _

</llo_original>
